<compile_context>
chip_gen: v7x
topology: tpu7x:2x2x1
jax: 0.10.0
libtpu: 0.0.40
codegen_flags: <defaults>
</compile_context>

<pallas_src>
import jax
import jax.numpy as jnp
import numpy as np
from jax.experimental import pallas as pl
from jax.experimental.pallas import tpu as pltpu


def _log_embed_kernel(sizes_ref, lo_ref, hi_ref, emb_t_ref, out_t_ref):
    s = sizes_ref[...]        # (1, TN)  f32, lane-dense sizes tile
    lo = lo_ref[...]          # (V, 1)   f32, bucket lower edges (lo[0] = -inf)
    hi = hi_ref[...]          # (V, 1)   f32, bucket upper edges (hi[-1] = +inf)

    # Bucket one-hot via interval membership: lo[k] <= s < hi[k]  -> (V, TN).
    # Two VPU compares + one and; no cross-lane reduce, no iota, no equality.
    onehot = jnp.logical_and(s >= lo, s < hi).astype(jnp.float32)

    # Row gather as E^T @ onehot on the MXU. Output tile (D, TN) is lane-dense
    # (TN is a multiple of 128) -> unmasked vector stores / dense writeback.
    out_t_ref[...] = jnp.dot(
        emb_t_ref[...], onehot, preferred_element_type=jnp.float32
    ).astype(out_t_ref.dtype)


def _xla_small_batch(sizes, boundaries, embedding_matrix):
    """Latency path for tiny batches: fused XLA, no padding / kernel launch."""
    b = boundaries.astype(jnp.float32)
    s = sizes.astype(jnp.float32)
    # index = first i with boundaries[i] > size == count(boundaries <= size)
    idx = jnp.sum(b[None, :] <= s[:, None], axis=-1).astype(jnp.int32)
    # TODO(synk): PyTorch raises StopIteration for out-of-range sizes; we clamp.
    idx = jnp.minimum(idx, b.shape[0] - 1)
    return jnp.take(embedding_matrix.astype(jnp.float32), idx, axis=0)


def logarithmic_embed(
    sizes,
    boundaries,
    embedding_matrix,
    *,
    block_n=4096,
    small_n_threshold=2048,
    transposed_output=False,
):
    """sizes: (N,) f32, boundaries: (V,) f32 ascending, embedding_matrix: (V, D) f32.

    Returns (N, D) embeddings, or (D, N) if transposed_output=True (lets the
    consumer skip the extra HBM transpose pass over the output).
    """
    assert block_n % 128 == 0, "block_n must be a multiple of 128 (lane-dense tiles)"
    n = sizes.shape[0]
    v, d = embedding_matrix.shape

    # ---- Small-batch fast path (module's typical usage: a handful of floats) ----
    if n < small_n_threshold:
        out = _xla_small_batch(sizes, boundaries, embedding_matrix)
        return out.T if transposed_output else out

    # ---- Large-batch Pallas path ----
    # Effective N tile: keep it large (amortize per-step overhead) but keep >= 2
    # grid steps where possible so v7x's two TensorCores both get work.
    eff_block = block_n
    if -(-n // eff_block) < 2:
        eff_block = max(128, ((-(-n // 2) + 127) // 128) * 128)
    n_pad = (-(-n // eff_block)) * eff_block

    # Padded lanes land in bucket 0 and are sliced away after the call.
    sizes_pad = jnp.pad(sizes.astype(jnp.float32), (0, n_pad - n)).reshape(1, n_pad)

    b = boundaries.astype(jnp.float32)
    lo = jnp.concatenate(
        [jnp.full((1,), -jnp.inf, dtype=jnp.float32), b[:-1]]
    ).reshape(v, 1)
    hi = b.at[-1].set(jnp.inf).reshape(v, 1)  # clamp out-of-range to last bucket

    emb_t = embedding_matrix.astype(jnp.float32).T  # (D, V); layout plumbing only

    # VMEM budget: constant-index_map inputs (lo/hi/E^T) still double-buffer;
    # (V,1) f32 lane-pads to (V,128). Keep an explicit limit with headroom so the
    # large tile stays safe on v7x's 64 MiB physical / 32 MiB default scoped VMEM.
    vmem_est = (
        2 * (1 * eff_block * 4)        # sizes tile, double-buffered
        + 2 * 2 * (v * 128 * 4)        # lo + hi, lane-padded, double-buffered
        + 2 * (d * v * 4)              # E^T, double-buffered
        + 2 * (d * eff_block * 4)      # output tile, double-buffered
        + (v * eff_block * 4)          # one-hot intermediate
    )
    vmem_limit = min(64 << 20, max(16 << 20, 2 * vmem_est))

    cost = pl.CostEstimate(
        flops=2 * n_pad * v * d,
        transcendentals=0,
        bytes_accessed=(n_pad + 2 * v + v * d + n_pad * d) * 4,
    )

    out_t = pl.pallas_call(
        _log_embed_kernel,
        out_shape=jax.ShapeDtypeStruct((d, n_pad), jnp.float32),
        grid_spec=pltpu.PrefetchScalarGridSpec(
            num_scalar_prefetch=0,
            grid=(n_pad // eff_block,),
            in_specs=[
                pl.BlockSpec((1, eff_block), lambda i: (0, i)),  # sizes: tiled over N
                pl.BlockSpec((v, 1), lambda i: (0, 0)),          # lo: VMEM-resident
                pl.BlockSpec((v, 1), lambda i: (0, 0)),          # hi: VMEM-resident
                pl.BlockSpec((d, v), lambda i: (0, 0)),          # E^T: VMEM-resident
            ],
            out_specs=pl.BlockSpec((d, eff_block), lambda i: (0, i)),
        ),
        compiler_params=pltpu.CompilerParams(
            # "parallel" lets v7x shard N-tiles across its 2 TensorCores; the
            # >=2-tile logic above guarantees both cores get work when N allows.
            dimension_semantics=("parallel",),
            vmem_limit_bytes=vmem_limit,
        ),
        cost_estimate=cost,
    )(sizes_pad, lo, hi, emb_t)

    if transposed_output:
        return out_t[:, :n]       # (D, N), lane-dense, no extra HBM pass
    return out_t[:, :n].T         # (N, D), matches the PyTorch module layout


if __name__ == "__main__":
    # Module config: embedding_dim=32, max_size=1024, max_vocab_size=128.
    embedding_dim = 32
    max_size = 1024
    max_vocab_size = 128

    # Boundaries exactly as in the PyTorch __init__.
    boundaries = jnp.asarray(
        np.logspace(0, np.log10(max_size), num=max_vocab_size).astype(np.float32)
    )

    key = jax.random.PRNGKey(0)
    k_emb, k_sizes, k_sizes2 = jax.random.split(key, 3)
    # nn.Embedding default init: N(0, 1).
    embedding_matrix = jax.random.normal(
        k_emb, (max_vocab_size, embedding_dim), dtype=jnp.float32
    )

    def reference(s):
        # index = first i with boundaries[i] > size == count(boundaries <= size)
        idx = jnp.sum(boundaries[None, :] <= s[:, None], axis=-1).astype(jnp.int32)
        return embedding_matrix[idx]

    # 1) Typical module usage: tiny batch -> XLA fast path (no pad/launch latency).
    sizes = jax.random.uniform(
        k_sizes, (8,), dtype=jnp.float32, minval=0.0, maxval=float(max_size) - 1.0
    )
    out = jax.block_until_ready(logarithmic_embed(sizes, boundaries, embedding_matrix))
    np.testing.assert_allclose(
        np.asarray(out), np.asarray(reference(sizes)), rtol=1e-5, atol=1e-5
    )

    # 2) Pallas path, forced on a moderate batch: N=1000 splits into 2 lane-dense
    #    tiles of 512 (>=2 grid steps for v7x megacore), exercising padding + grid.
    sizes2 = jax.random.uniform(
        k_sizes2, (1000,), dtype=jnp.float32, minval=0.0, maxval=float(max_size) - 1.0
    )
    out2 = jax.block_until_ready(
        logarithmic_embed(sizes2, boundaries, embedding_matrix, small_n_threshold=0)
    )
    np.testing.assert_allclose(
        np.asarray(out2), np.asarray(reference(sizes2)), rtol=1e-5, atol=1e-5
    )

    # 3) Transposed (D, N) output variant: skips the wrapper-side HBM transpose.
    out2_t = jax.block_until_ready(
        logarithmic_embed(
            sizes2, boundaries, embedding_matrix,
            small_n_threshold=0, transposed_output=True,
        )
    )
    np.testing.assert_allclose(
        np.asarray(out2_t).T, np.asarray(reference(sizes2)), rtol=1e-5, atol=1e-5
    )

    print("KERNEL_OK")
</pallas_src>

<mosaic_0001>
module attributes {stable_mosaic.version = 11 : i64} {
  func.func @_log_embed_kernel(%arg0: i32, %arg1: memref<1x512xf32, #tpu.memory_space<vmem>>, %arg2: memref<128x1xf32, #tpu.memory_space<vmem>>, %arg3: memref<128x1xf32, #tpu.memory_space<vmem>>, %arg4: memref<32x128xf32, #tpu.memory_space<vmem>>, %arg5: memref<32x512xf32, #tpu.memory_space<vmem>>) attributes {dimension_semantics = [#tpu.dimension_semantics<parallel>], iteration_bounds = array<i64: 2>, scalar_prefetch = 0 : i64, scratch_operands = 0 : i64, tpu.core_type = #tpu.core_type<tc>, window_params = [{transform_indices = @transform_0, window_bounds = array<i64: 1, 512>}, {pipeline_mode = #tpu.pipeline_mode<synchronous>, transform_indices = @transform_1, window_bounds = array<i64: 128, 1>}, {pipeline_mode = #tpu.pipeline_mode<synchronous>, transform_indices = @transform_2, window_bounds = array<i64: 128, 1>}, {pipeline_mode = #tpu.pipeline_mode<synchronous>, transform_indices = @transform_3, window_bounds = array<i64: 32, 128>}, {transform_indices = @transform_4, window_bounds = array<i64: 32, 512>}]} {
    %c0 = arith.constant 0 : index
    %c0_0 = arith.constant 0 : index
    %0 = vector.load %arg1[%c0, %c0_0] : memref<1x512xf32, #tpu.memory_space<vmem>>, vector<1x512xf32>
    %c0_1 = arith.constant 0 : index
    %c0_2 = arith.constant 0 : index
    %1 = vector.load %arg2[%c0_1, %c0_2] : memref<128x1xf32, #tpu.memory_space<vmem>>, vector<128x1xf32>
    %c0_3 = arith.constant 0 : index
    %c0_4 = arith.constant 0 : index
    %2 = vector.load %arg3[%c0_3, %c0_4] : memref<128x1xf32, #tpu.memory_space<vmem>>, vector<128x1xf32>
    %3 = vector.broadcast %0 : vector<1x512xf32> to vector<128x512xf32>
    %4 = vector.broadcast %1 : vector<128x1xf32> to vector<128x512xf32>
    %5 = arith.cmpf oge, %3, %4 : vector<128x512xf32>
    %6 = vector.broadcast %0 : vector<1x512xf32> to vector<128x512xf32>
    %7 = vector.broadcast %2 : vector<128x1xf32> to vector<128x512xf32>
    %8 = arith.cmpf olt, %6, %7 : vector<128x512xf32>
    %9 = arith.andi %5, %8 : vector<128x512xi1>
    %10 = arith.extui %9 : vector<128x512xi1> to vector<128x512xi32>
    %11 = arith.sitofp %10 : vector<128x512xi32> to vector<128x512xf32>
    %c0_5 = arith.constant 0 : index
    %c0_6 = arith.constant 0 : index
    %12 = vector.load %arg4[%c0_5, %c0_6] : memref<32x128xf32, #tpu.memory_space<vmem>>, vector<32x128xf32>
    %cst = arith.constant dense<0.000000e+00> : vector<32x512xf32>
    %13 = tpu.matmul %12, %11, %cst {dimension_numbers = #tpu.dot_dimension_numbers<[1], [0], [0], [1], [0, 0, 1, 1], [], []>} : vector<32x128xf32>, vector<128x512xf32>, vector<32x512xf32> -> vector<32x512xf32>
    %c0_7 = arith.constant 0 : index
    %c0_8 = arith.constant 0 : index
    %14 = vector.load %arg5[%c0_7, %c0_8] : memref<32x512xf32, #tpu.memory_space<vmem>>, vector<32x512xf32>
    tpu.vector_store %arg5[%c0_7, %c0_8], %13 {strides = array<i32>} : memref<32x512xf32, #tpu.memory_space<vmem>>, vector<32x512xf32>,
    return
  }
  func.func @transform_0(%arg0: i32) -> (i32, i32) {
    %c0_i32 = arith.constant 0 : i32
    %c0_i32_0 = arith.constant 0 : i32
    return %c0_i32, %arg0 : i32, i32
  }
  func.func @transform_1(%arg0: i32) -> (i32, i32) {
    %c0_i32 = arith.constant 0 : i32
    %c0_i32_0 = arith.constant 0 : i32
    %c0_i32_1 = arith.constant 0 : i32
    return %c0_i32, %c0_i32_0 : i32, i32
  }
  func.func @transform_2(%arg0: i32) -> (i32, i32) {
    %c0_i32 = arith.constant 0 : i32
    %c0_i32_0 = arith.constant 0 : i32
    %c0_i32_1 = arith.constant 0 : i32
    return %c0_i32, %c0_i32_0 : i32, i32
  }
  func.func @transform_3(%arg0: i32) -> (i32, i32) {
    %c0_i32 = arith.constant 0 : i32
    %c0_i32_0 = arith.constant 0 : i32
    %c0_i32_1 = arith.constant 0 : i32
    return %c0_i32, %c0_i32_0 : i32, i32
  }
  func.func @transform_4(%arg0: i32) -> (i32, i32) {
    %c0_i32 = arith.constant 0 : i32
    %c0_i32_0 = arith.constant 0 : i32
    return %c0_i32, %arg0 : i32, i32
  }
}

</mosaic_0001>

<llo_original>
// kernel: tpu_custom_call.1
$region0: #{tpu_custom_call.1}
  #allocation0 [shape = 'u32[]', space=smem, size = 0x4, offset = 0x4, fixed_abs, tag = 'smem constant byte address 0x4 - core index']
  #allocation1 [shape = 'u32[144,128]{1,0:T(1,128)}', space=vmem, size = 0x12000, scoped, tag = 'internal scratch']
  %s0 = inlined_call_operand.vmem [shape: f32[1,1024], index: 0, kind: input, shape index: {}]
  %s1 = inlined_call_operand.vmem [shape: f32[128,1], index: 1, kind: input, shape index: {}]
  %s2 = inlined_call_operand.vmem [shape: f32[128,1], index: 2, kind: input, shape index: {}]
  %s3 = inlined_call_operand.vmem [shape: f32[32,128], index: 3, kind: input, shape index: {}]
  %s4 = inlined_call_operand.hbm [shape: f32[32,1024], index: 4, kind: output, shape index: {}]
  %s5 = sld [smem:[#allocation0]]
  $region49: #{tpu_custom_call.1} parent=0
    _
  %s7 = ssub.s32 1, %s5
  %s8 = scalar_select 0, %s7, %s5
  $region1: #{tpu_custom_call.1} parent=0
    #allocation2 [shape = 'u8[131072]{0}', space=vmem, size = 0x20000, scoped, tag = 'output window, operand 0']
    #allocation3 [shape = 's32[2]{0}', space=sflag, size = 0x8, scoped, tag = 'scoped memory for tpu_custom_call.1']
    %9 = vsyncpa [#allocation3], 0
    %s10 = scalar_lea.sflag [#allocation3], 1
    %11 = vsyncpa %s10, 0
    loop: start=0, step=1, limit=4
    $region2: #{tpu_custom_call.1} parent=1 // loop_pre_header
      _
    $region3: #{tpu_custom_call.1} parent=1 // loop_header
      %s13 = sphi 0, %s17
      %p14 = scmp.ge.s32.totalorder %s13, 4
      %s23 = sphi 0, %s25
      %s26 = sphi 0, %s23
      %s27 = sphi 0, %s26
      %s43 = sphi 0, %s27
      %s47 = sphi 0, %s47
      %s49 = sphi 0, %s47
      %s50 = sphi 0, %s49
      %s64 = sphi 0, %s50
      %s68 = sphi 0, %s68
      %s70 = sphi 0, %s68
      %s71 = sphi 0, %s70
      %s85 = sphi 0, %s71
      %s89 = sphi 0, %s89
      %s91 = sphi 0, %s89
      %s92 = sphi 0, %s91
      %s106 = sphi 0, %s92
      %s112 = sphi 0, %s114
      %s115 = sphi 0, %s112
      %s116 = sphi 0, %s115
      %s132 = sphi 0, %s116
    $region4: #{tpu_custom_call.1} parent=1 // loop_header_branch
      %16 = sbr.rel (%p14) target = $region8
    $region5: #{tpu_custom_call.1} parent=1 // loop_body
      %s18 = ssub.s32 %s13, 1
      %s19 = ssub.s32 %s13, 2
      %s20 = sadd.s32 %s13, 1
      %s21 = ssub.s32 %s13, %s20
      %p22 = scmp.eq.s32.totalorder %s21, 0
      %s24 = sadd.s32 %s23, 1
      %s25 = scalar_select %p22, %s23, %s24
      %p28 = pneg %p22
      %p29 = scmp.eq.s32.totalorder %s13, 1
      %p30 = por %p28, %p29
      %p31 = scmp.ne.s32.totalorder %s23, %s26
      %p32 = scmp.eq.s32.totalorder %s13, 0
      %p33 = por %p31, %p32
      %p34 = scmp.ne.s32.totalorder %s23, %s26
      %p35 = scmp.eq.s32.totalorder %s18, 1
      %p36 = por %p34, %p35
      %p37 = scmp.ne.s32.totalorder %s26, %s27
      %p38 = scmp.eq.s32.totalorder %s18, 0
      %p39 = por %p37, %p38
      %p40 = scmp.ne.s32.totalorder %s26, %s27
      %p41 = scmp.eq.s32.totalorder %s19, 1
      %p42 = por %p40, %p41
      %p44 = scmp.ne.s32.totalorder %s27, %s43
      %p45 = scmp.eq.s32.totalorder %s19, 0
      %p46 = por %p44, %p45
      %s48 = sadd.s32 %s47, 1
      %p51 = scmp.eq.s32.totalorder %s13, 1
      %p52 = scmp.ne.s32.totalorder %s47, %s49
      %p53 = scmp.eq.s32.totalorder %s13, 0
      %p54 = por %p52, %p53
      %p55 = scmp.ne.s32.totalorder %s47, %s49
      %p56 = scmp.eq.s32.totalorder %s18, 1
      %p57 = por %p55, %p56
      %p58 = scmp.ne.s32.totalorder %s49, %s50
      %p59 = scmp.eq.s32.totalorder %s18, 0
      %p60 = por %p58, %p59
      %p61 = scmp.ne.s32.totalorder %s49, %s50
      %p62 = scmp.eq.s32.totalorder %s19, 1
      %p63 = por %p61, %p62
      %p65 = scmp.ne.s32.totalorder %s50, %s64
      %p66 = scmp.eq.s32.totalorder %s19, 0
      %p67 = por %p65, %p66
      %s69 = sadd.s32 %s68, 1
      %p72 = scmp.eq.s32.totalorder %s13, 1
      %p73 = scmp.ne.s32.totalorder %s68, %s70
      %p74 = scmp.eq.s32.totalorder %s13, 0
      %p75 = por %p73, %p74
      %p76 = scmp.ne.s32.totalorder %s68, %s70
      %p77 = scmp.eq.s32.totalorder %s18, 1
      %p78 = por %p76, %p77
      %p79 = scmp.ne.s32.totalorder %s70, %s71
      %p80 = scmp.eq.s32.totalorder %s18, 0
      %p81 = por %p79, %p80
      %p82 = scmp.ne.s32.totalorder %s70, %s71
      %p83 = scmp.eq.s32.totalorder %s19, 1
      %p84 = por %p82, %p83
      %p86 = scmp.ne.s32.totalorder %s71, %s85
      %p87 = scmp.eq.s32.totalorder %s19, 0
      %p88 = por %p86, %p87
      %s90 = sadd.s32 %s89, 1
      %p93 = scmp.eq.s32.totalorder %s13, 1
      %p94 = scmp.ne.s32.totalorder %s89, %s91
      %p95 = scmp.eq.s32.totalorder %s13, 0
      %p96 = por %p94, %p95
      %p97 = scmp.ne.s32.totalorder %s89, %s91
      %p98 = scmp.eq.s32.totalorder %s18, 1
      %p99 = por %p97, %p98
      %p100 = scmp.ne.s32.totalorder %s91, %s92
      %p101 = scmp.eq.s32.totalorder %s18, 0
      %p102 = por %p100, %p101
      %p103 = scmp.ne.s32.totalorder %s91, %s92
      %p104 = scmp.eq.s32.totalorder %s19, 1
      %p105 = por %p103, %p104
      %p107 = scmp.ne.s32.totalorder %s92, %s106
      %p108 = scmp.eq.s32.totalorder %s19, 0
      %p109 = por %p107, %p108
      %s110 = ssub.s32 %s13, %s20
      %p111 = scmp.eq.s32.totalorder %s110, 0
      %s113 = sadd.s32 %s112, 1
      %s114 = scalar_select %p111, %s112, %s113
      %p117 = pneg %p111
      %p118 = scmp.eq.s32.totalorder %s13, 1
      %p119 = por %p117, %p118
      %p120 = scmp.ne.s32.totalorder %s112, %s115
      %p121 = scmp.eq.s32.totalorder %s13, 0
      %p122 = por %p120, %p121
      %p123 = scmp.ne.s32.totalorder %s112, %s115
      %p124 = scmp.eq.s32.totalorder %s18, 1
      %p125 = por %p123, %p124
      %p126 = scmp.ne.s32.totalorder %s115, %s116
      %p127 = scmp.eq.s32.totalorder %s18, 0
      %p128 = por %p126, %p127
      %p129 = scmp.ne.s32.totalorder %s115, %s116
      %p130 = scmp.eq.s32.totalorder %s19, 1
      %p131 = por %p129, %p130
      %p133 = scmp.ne.s32.totalorder %s116, %s132
      %p134 = scmp.eq.s32.totalorder %s19, 0
      %p135 = por %p133, %p134
      %p136 = scmp.le.s32.totalorder 1, %s13
      %p137 = scmp.lt.s32.totalorder %s13, 3
      %p138 = pnand %p136, %p137
      %p139 = pneg %p138
      // Predicated region
      $region9: #{tpu_custom_call.1} parent=5 // pred_check
        _
      $region10: #{tpu_custom_call.1} parent=5 // pred_check_branch
        %141 = sbr.rel (%p138) target = $region12
      $region11: #{tpu_custom_call.1} parent=5 // pred_region
        %s142 = ssub.s32 %s13, 1
        // Predicated region
        $region13: #{tpu_custom_call.1} parent=11 // pred_check
          %p143 = pneg %p60
        $region14: #{tpu_custom_call.1} parent=11 // pred_check_branch
          %145 = sbr.rel (%p143) target = $region16
        $region15: #{tpu_custom_call.1} parent=11 // pred_region
          _
        $region16: #{tpu_custom_call.1} parent=11 // pred_fallthru
          _
        // Predicated region
        $region17: #{tpu_custom_call.1} parent=11 // pred_check
          %p146 = pneg %p81
        $region18: #{tpu_custom_call.1} parent=11 // pred_check_branch
          %148 = sbr.rel (%p146) target = $region20
        $region19: #{tpu_custom_call.1} parent=11 // pred_region
          _
        $region20: #{tpu_custom_call.1} parent=11 // pred_fallthru
          _
        // Predicated region
        $region21: #{tpu_custom_call.1} parent=11 // pred_check
          %p149 = pneg %p102
        $region22: #{tpu_custom_call.1} parent=11 // pred_check_branch
          %151 = sbr.rel (%p149) target = $region24
        $region23: #{tpu_custom_call.1} parent=11 // pred_region
          _
        $region24: #{tpu_custom_call.1} parent=11 // pred_fallthru
          _
      $region12: #{tpu_custom_call.1} parent=5 // pred_fallthru
        _
      %p152 = scmp.lt.s32.totalorder %s13, 2
      // Predicated region
      $region25: #{tpu_custom_call.1} parent=5 // pred_check
        %p153 = pneg %p152
      $region26: #{tpu_custom_call.1} parent=5 // pred_check_branch
        %155 = sbr.rel (%p153) target = $region28
      $region27: #{tpu_custom_call.1} parent=5 // pred_region
        // Predicated region
        $region29: #{tpu_custom_call.1} parent=27 // pred_check
          %p156 = pneg %p33
        $region30: #{tpu_custom_call.1} parent=27 // pred_check_branch
          %158 = sbr.rel (%p156) target = $region32
        $region31: #{tpu_custom_call.1} parent=27 // pred_region
          %s159 = smul.u32 4, %s13
          %p160 = scmp.lt.s32.totalorder %s159, 7
          %s161 = scalar_select %p160, %s159, 7
          %s162 = scalar_lea.vmem %s0, %s161
          %s163 = smul.u32 4, %s13
        $region32: #{tpu_custom_call.1} parent=27 // pred_fallthru
          _
      $region28: #{tpu_custom_call.1} parent=5 // pred_fallthru
        _
      %p164 = scmp.le.s32.totalorder 1, %s13
      %p165 = scmp.lt.s32.totalorder %s13, 3
      %p166 = pnand %p164, %p165
      %p167 = pneg %p166
      // Predicated region
      $region33: #{tpu_custom_call.1} parent=5 // pred_check
        _
      $region34: #{tpu_custom_call.1} parent=5 // pred_check_branch
        %169 = sbr.rel (%p166) target = $region36
      $region35: #{tpu_custom_call.1} parent=5 // pred_region
        %s170 = ssub.s32 %s13, 1
        %s171 = smul.u32 4, %s18
        %p172 = scmp.lt.s32.totalorder %s171, 7
        %s173 = scalar_select %p172, %s171, 7
        %s174 = scalar_lea.vmem %s0, %s173
        %p175 = pneg %p39
        %p176 = pneg %p36
        %p177 = pneg %p60
        %p178 = pneg %p57
        %p179 = pneg %p81
        %p180 = pneg %p78
        %p181 = pneg %p102
        %p182 = pneg %p99
        %p183 = pneg %p128
        %p184 = pneg %p125
        %s185 = sand.u32 %s115, 1
        %s186 = scalar_lea.sflag [#allocation3], %s185
        %s187 = sand.u32 %s115, 1
        %s188 = smul.addr %s187, 128
        %s189 = scalar_lea.vmem [#allocation2], %s188
        %s190 = smul.u32 4, %s18
        %p191 = scmp.lt.s32.totalorder %s190, 7
        %s192 = scalar_select %p191, %s190, 7
        %s193 = scalar_lea.vmem %s0, %s192
        %s194 = smul.u32 4, %s18
        %s195 = smul.u32 4, %s18
        %v196 = vld [vmem:[%s193] sm:$0xf]
        %v197 = vld [vmem:[%s1] sm:$0xff]
        %v198 = vld [vmem:[%s1 + $0x8] sm:$0xff]
        %v199 = vld [vmem:[%s1 + $0x10] sm:$0xff]
        %v200 = vld [vmem:[%s1 + $0x18] sm:$0xff]
        %v201 = vld [vmem:[%s1 + $0x20] sm:$0xff]
        %v202 = vld [vmem:[%s1 + $0x28] sm:$0xff]
        %v203 = vld [vmem:[%s1 + $0x30] sm:$0xff]
        %v204 = vld [vmem:[%s1 + $0x38] sm:$0xff]
        %v205 = vld [vmem:[%s1 + $0x40] sm:$0xff]
        %v206 = vld [vmem:[%s1 + $0x48] sm:$0xff]
        %v207 = vld [vmem:[%s1 + $0x50] sm:$0xff]
        %v208 = vld [vmem:[%s1 + $0x58] sm:$0xff]
        %v209 = vld [vmem:[%s1 + $0x60] sm:$0xff]
        %v210 = vld [vmem:[%s1 + $0x68] sm:$0xff]
        %v211 = vld [vmem:[%s1 + $0x70] sm:$0xff]
        %v212 = vld [vmem:[%s1 + $0x78] sm:$0xff]
        %v213 = vld [vmem:[%s2] sm:$0xff]
        %v214 = vld [vmem:[%s2 + $0x8] sm:$0xff]
        %v215 = vld [vmem:[%s2 + $0x10] sm:$0xff]
        %v216 = vld [vmem:[%s2 + $0x18] sm:$0xff]
        %v217 = vld [vmem:[%s2 + $0x20] sm:$0xff]
        %v218 = vld [vmem:[%s2 + $0x28] sm:$0xff]
        %v219 = vld [vmem:[%s2 + $0x30] sm:$0xff]
        %v220 = vld [vmem:[%s2 + $0x38] sm:$0xff]
        %v221 = vld [vmem:[%s2 + $0x40] sm:$0xff]
        %v222 = vld [vmem:[%s2 + $0x48] sm:$0xff]
        %v223 = vld [vmem:[%s2 + $0x50] sm:$0xff]
        %v224 = vld [vmem:[%s2 + $0x58] sm:$0xff]
        %v225 = vld [vmem:[%s2 + $0x60] sm:$0xff]
        %v226 = vld [vmem:[%s2 + $0x68] sm:$0xff]
        %v227 = vld [vmem:[%s2 + $0x70] sm:$0xff]
        %v228 = vld [vmem:[%s2 + $0x78] sm:$0xff]
        %v230 = vlaneseq
        %v231 = vshrl.u32 %v230, 7
        %v232 = vsub.s32 0, %v231
        %v233 = vrot.slane %v196, %v232
        %v234 = vlaneseq
        %v235 = vshrl.u32 %v234, 7
        %v236 = vsub.s32 1, %v235
        %v237 = vrot.slane %v196, %v236
        %v238 = vlaneseq
        %v239 = vshrl.u32 %v238, 7
        %v240 = vsub.s32 2, %v239
        %v241 = vrot.slane %v196, %v240
        %v242 = vlaneseq
        %v243 = vshrl.u32 %v242, 7
        %v244 = vsub.s32 3, %v243
        %v245 = vrot.slane %v196, %v244
        %251 = vset.pattern.permute.xlu0 0
        %252 = vperm.xlu0 %251, %v197
        %v253 = vpop.permute.xlu0 %252
        %256 = vset.pattern.permute.xlu0 0
        %257 = vperm.xlu0 %256, %v198
        %v258 = vpop.permute.xlu0 %257
        %261 = vset.pattern.permute.xlu0 0
        %262 = vperm.xlu0 %261, %v199
        %v263 = vpop.permute.xlu0 %262
        %266 = vset.pattern.permute.xlu0 0
        %267 = vperm.xlu0 %266, %v200
        %v268 = vpop.permute.xlu0 %267
        %271 = vset.pattern.permute.xlu0 0
        %272 = vperm.xlu0 %271, %v201
        %v273 = vpop.permute.xlu0 %272
        %276 = vset.pattern.permute.xlu0 0
        %277 = vperm.xlu0 %276, %v202
        %v278 = vpop.permute.xlu0 %277
        %281 = vset.pattern.permute.xlu0 0
        %282 = vperm.xlu0 %281, %v203
        %v283 = vpop.permute.xlu0 %282
        %286 = vset.pattern.permute.xlu0 0
        %287 = vperm.xlu0 %286, %v204
        %v288 = vpop.permute.xlu0 %287
        %291 = vset.pattern.permute.xlu0 0
        %292 = vperm.xlu0 %291, %v205
        %v293 = vpop.permute.xlu0 %292
        %296 = vset.pattern.permute.xlu0 0
        %297 = vperm.xlu0 %296, %v206
        %v298 = vpop.permute.xlu0 %297
        %301 = vset.pattern.permute.xlu0 0
        %302 = vperm.xlu0 %301, %v207
        %v303 = vpop.permute.xlu0 %302
        %306 = vset.pattern.permute.xlu0 0
        %307 = vperm.xlu0 %306, %v208
        %v308 = vpop.permute.xlu0 %307
        %311 = vset.pattern.permute.xlu0 0
        %312 = vperm.xlu0 %311, %v209
        %v313 = vpop.permute.xlu0 %312
        %316 = vset.pattern.permute.xlu0 0
        %317 = vperm.xlu0 %316, %v210
        %v318 = vpop.permute.xlu0 %317
        %321 = vset.pattern.permute.xlu0 0
        %322 = vperm.xlu0 %321, %v211
        %v323 = vpop.permute.xlu0 %322
        %326 = vset.pattern.permute.xlu0 0
        %327 = vperm.xlu0 %326, %v212
        %v328 = vpop.permute.xlu0 %327
        %vm330 = vcmp.ge.f32.partialorder %v233, %v253
        %vm331 = vcmp.ge.f32.partialorder %v237, %v253
        %vm332 = vcmp.ge.f32.partialorder %v241, %v253
        %vm333 = vcmp.ge.f32.partialorder %v245, %v253
        %vm334 = vcmp.ge.f32.partialorder %v233, %v258
        %vm335 = vcmp.ge.f32.partialorder %v237, %v258
        %vm336 = vcmp.ge.f32.partialorder %v241, %v258
        %vm337 = vcmp.ge.f32.partialorder %v245, %v258
        %vm338 = vcmp.ge.f32.partialorder %v233, %v263
        %vm339 = vcmp.ge.f32.partialorder %v237, %v263
        %vm340 = vcmp.ge.f32.partialorder %v241, %v263
        %vm341 = vcmp.ge.f32.partialorder %v245, %v263
        %vm342 = vcmp.ge.f32.partialorder %v233, %v268
        %vm343 = vcmp.ge.f32.partialorder %v237, %v268
        %vm344 = vcmp.ge.f32.partialorder %v241, %v268
        %vm345 = vcmp.ge.f32.partialorder %v245, %v268
        %vm346 = vcmp.ge.f32.partialorder %v233, %v273
        %vm347 = vcmp.ge.f32.partialorder %v237, %v273
        %vm348 = vcmp.ge.f32.partialorder %v241, %v273
        %vm349 = vcmp.ge.f32.partialorder %v245, %v273
        %vm350 = vcmp.ge.f32.partialorder %v233, %v278
        %vm351 = vcmp.ge.f32.partialorder %v237, %v278
        %vm352 = vcmp.ge.f32.partialorder %v241, %v278
        %vm353 = vcmp.ge.f32.partialorder %v245, %v278
        %vm354 = vcmp.ge.f32.partialorder %v233, %v283
        %vm355 = vcmp.ge.f32.partialorder %v237, %v283
        %vm356 = vcmp.ge.f32.partialorder %v241, %v283
        %vm357 = vcmp.ge.f32.partialorder %v245, %v283
        %vm358 = vcmp.ge.f32.partialorder %v233, %v288
        %vm359 = vcmp.ge.f32.partialorder %v237, %v288
        %vm360 = vcmp.ge.f32.partialorder %v241, %v288
        %vm361 = vcmp.ge.f32.partialorder %v245, %v288
        %vm362 = vcmp.ge.f32.partialorder %v233, %v293
        %vm363 = vcmp.ge.f32.partialorder %v237, %v293
        %vm364 = vcmp.ge.f32.partialorder %v241, %v293
        %vm365 = vcmp.ge.f32.partialorder %v245, %v293
        %vm366 = vcmp.ge.f32.partialorder %v233, %v298
        %vm367 = vcmp.ge.f32.partialorder %v237, %v298
        %vm368 = vcmp.ge.f32.partialorder %v241, %v298
        %vm369 = vcmp.ge.f32.partialorder %v245, %v298
        %vm370 = vcmp.ge.f32.partialorder %v233, %v303
        %vm371 = vcmp.ge.f32.partialorder %v237, %v303
        %vm372 = vcmp.ge.f32.partialorder %v241, %v303
        %vm373 = vcmp.ge.f32.partialorder %v245, %v303
        %vm374 = vcmp.ge.f32.partialorder %v233, %v308
        %vm375 = vcmp.ge.f32.partialorder %v237, %v308
        %vm376 = vcmp.ge.f32.partialorder %v241, %v308
        %vm377 = vcmp.ge.f32.partialorder %v245, %v308
        %vm378 = vcmp.ge.f32.partialorder %v233, %v313
        %vm379 = vcmp.ge.f32.partialorder %v237, %v313
        %vm380 = vcmp.ge.f32.partialorder %v241, %v313
        %vm381 = vcmp.ge.f32.partialorder %v245, %v313
        %vm382 = vcmp.ge.f32.partialorder %v233, %v318
        %vm383 = vcmp.ge.f32.partialorder %v237, %v318
        %vm384 = vcmp.ge.f32.partialorder %v241, %v318
        %vm385 = vcmp.ge.f32.partialorder %v245, %v318
        %vm386 = vcmp.ge.f32.partialorder %v233, %v323
        %vm387 = vcmp.ge.f32.partialorder %v237, %v323
        %vm388 = vcmp.ge.f32.partialorder %v241, %v323
        %vm389 = vcmp.ge.f32.partialorder %v245, %v323
        %vm390 = vcmp.ge.f32.partialorder %v233, %v328
        %vm391 = vcmp.ge.f32.partialorder %v237, %v328
        %vm392 = vcmp.ge.f32.partialorder %v241, %v328
        %vm393 = vcmp.ge.f32.partialorder %v245, %v328
        %395 = vset.pattern.permute.xlu0 0
        %396 = vperm.xlu0 %395, %v213
        %v397 = vpop.permute.xlu0 %396
        %400 = vset.pattern.permute.xlu0 0
        %401 = vperm.xlu0 %400, %v214
        %v402 = vpop.permute.xlu0 %401
        %405 = vset.pattern.permute.xlu0 0
        %406 = vperm.xlu0 %405, %v215
        %v407 = vpop.permute.xlu0 %406
        %410 = vset.pattern.permute.xlu0 0
        %411 = vperm.xlu0 %410, %v216
        %v412 = vpop.permute.xlu0 %411
        %415 = vset.pattern.permute.xlu0 0
        %416 = vperm.xlu0 %415, %v217
        %v417 = vpop.permute.xlu0 %416
        %420 = vset.pattern.permute.xlu0 0
        %421 = vperm.xlu0 %420, %v218
        %v422 = vpop.permute.xlu0 %421
        %425 = vset.pattern.permute.xlu0 0
        %426 = vperm.xlu0 %425, %v219
        %v427 = vpop.permute.xlu0 %426
        %430 = vset.pattern.permute.xlu0 0
        %431 = vperm.xlu0 %430, %v220
        %v432 = vpop.permute.xlu0 %431
        %435 = vset.pattern.permute.xlu0 0
        %436 = vperm.xlu0 %435, %v221
        %v437 = vpop.permute.xlu0 %436
        %440 = vset.pattern.permute.xlu0 0
        %441 = vperm.xlu0 %440, %v222
        %v442 = vpop.permute.xlu0 %441
        %445 = vset.pattern.permute.xlu0 0
        %446 = vperm.xlu0 %445, %v223
        %v447 = vpop.permute.xlu0 %446
        %450 = vset.pattern.permute.xlu0 0
        %451 = vperm.xlu0 %450, %v224
        %v452 = vpop.permute.xlu0 %451
        %455 = vset.pattern.permute.xlu0 0
        %456 = vperm.xlu0 %455, %v225
        %v457 = vpop.permute.xlu0 %456
        %460 = vset.pattern.permute.xlu0 0
        %461 = vperm.xlu0 %460, %v226
        %v462 = vpop.permute.xlu0 %461
        %465 = vset.pattern.permute.xlu0 0
        %466 = vperm.xlu0 %465, %v227
        %v467 = vpop.permute.xlu0 %466
        %470 = vset.pattern.permute.xlu0 0
        %471 = vperm.xlu0 %470, %v228
        %v472 = vpop.permute.xlu0 %471
        %vm474 = vcmp.lt.f32.partialorder %v233, %v397
        %vm475 = vcmp.lt.f32.partialorder %v237, %v397
        %vm476 = vcmp.lt.f32.partialorder %v241, %v397
        %vm477 = vcmp.lt.f32.partialorder %v245, %v397
        %vm478 = vcmp.lt.f32.partialorder %v233, %v402
        %vm479 = vcmp.lt.f32.partialorder %v237, %v402
        %vm480 = vcmp.lt.f32.partialorder %v241, %v402
        %vm481 = vcmp.lt.f32.partialorder %v245, %v402
        %vm482 = vcmp.lt.f32.partialorder %v233, %v407
        %vm483 = vcmp.lt.f32.partialorder %v237, %v407
        %vm484 = vcmp.lt.f32.partialorder %v241, %v407
        %vm485 = vcmp.lt.f32.partialorder %v245, %v407
        %vm486 = vcmp.lt.f32.partialorder %v233, %v412
        %vm487 = vcmp.lt.f32.partialorder %v237, %v412
        %vm488 = vcmp.lt.f32.partialorder %v241, %v412
        %vm489 = vcmp.lt.f32.partialorder %v245, %v412
        %vm490 = vcmp.lt.f32.partialorder %v233, %v417
        %vm491 = vcmp.lt.f32.partialorder %v237, %v417
        %vm492 = vcmp.lt.f32.partialorder %v241, %v417
        %vm493 = vcmp.lt.f32.partialorder %v245, %v417
        %vm494 = vcmp.lt.f32.partialorder %v233, %v422
        %vm495 = vcmp.lt.f32.partialorder %v237, %v422
        %vm496 = vcmp.lt.f32.partialorder %v241, %v422
        %vm497 = vcmp.lt.f32.partialorder %v245, %v422
        %vm498 = vcmp.lt.f32.partialorder %v233, %v427
        %vm499 = vcmp.lt.f32.partialorder %v237, %v427
        %vm500 = vcmp.lt.f32.partialorder %v241, %v427
        %vm501 = vcmp.lt.f32.partialorder %v245, %v427
        %vm502 = vcmp.lt.f32.partialorder %v233, %v432
        %vm503 = vcmp.lt.f32.partialorder %v237, %v432
        %vm504 = vcmp.lt.f32.partialorder %v241, %v432
        %vm505 = vcmp.lt.f32.partialorder %v245, %v432
        %vm506 = vcmp.lt.f32.partialorder %v233, %v437
        %vm507 = vcmp.lt.f32.partialorder %v237, %v437
        %vm508 = vcmp.lt.f32.partialorder %v241, %v437
        %vm509 = vcmp.lt.f32.partialorder %v245, %v437
        %vm510 = vcmp.lt.f32.partialorder %v233, %v442
        %vm511 = vcmp.lt.f32.partialorder %v237, %v442
        %vm512 = vcmp.lt.f32.partialorder %v241, %v442
        %vm513 = vcmp.lt.f32.partialorder %v245, %v442
        %vm514 = vcmp.lt.f32.partialorder %v233, %v447
        %vm515 = vcmp.lt.f32.partialorder %v237, %v447
        %vm516 = vcmp.lt.f32.partialorder %v241, %v447
        %vm517 = vcmp.lt.f32.partialorder %v245, %v447
        %vm518 = vcmp.lt.f32.partialorder %v233, %v452
        %vm519 = vcmp.lt.f32.partialorder %v237, %v452
        %vm520 = vcmp.lt.f32.partialorder %v241, %v452
        %vm521 = vcmp.lt.f32.partialorder %v245, %v452
        %vm522 = vcmp.lt.f32.partialorder %v233, %v457
        %vm523 = vcmp.lt.f32.partialorder %v237, %v457
        %vm524 = vcmp.lt.f32.partialorder %v241, %v457
        %vm525 = vcmp.lt.f32.partialorder %v245, %v457
        %vm526 = vcmp.lt.f32.partialorder %v233, %v462
        %vm527 = vcmp.lt.f32.partialorder %v237, %v462
        %vm528 = vcmp.lt.f32.partialorder %v241, %v462
        %vm529 = vcmp.lt.f32.partialorder %v245, %v462
        %vm530 = vcmp.lt.f32.partialorder %v233, %v467
        %vm531 = vcmp.lt.f32.partialorder %v237, %v467
        %vm532 = vcmp.lt.f32.partialorder %v241, %v467
        %vm533 = vcmp.lt.f32.partialorder %v245, %v467
        %vm534 = vcmp.lt.f32.partialorder %v233, %v472
        %vm535 = vcmp.lt.f32.partialorder %v237, %v472
        %vm536 = vcmp.lt.f32.partialorder %v241, %v472
        %vm537 = vcmp.lt.f32.partialorder %v245, %v472
        %vm538 = vmand %vm330, %vm474
        %vm539 = vmand %vm331, %vm475
        %vm540 = vmand %vm332, %vm476
        %vm541 = vmand %vm333, %vm477
        %vm542 = vmand %vm334, %vm478
        %vm543 = vmand %vm335, %vm479
        %vm544 = vmand %vm336, %vm480
        %vm545 = vmand %vm337, %vm481
        %vm546 = vmand %vm338, %vm482
        %vm547 = vmand %vm339, %vm483
        %vm548 = vmand %vm340, %vm484
        %vm549 = vmand %vm341, %vm485
        %vm550 = vmand %vm342, %vm486
        %vm551 = vmand %vm343, %vm487
        %vm552 = vmand %vm344, %vm488
        %vm553 = vmand %vm345, %vm489
        %vm554 = vmand %vm346, %vm490
        %vm555 = vmand %vm347, %vm491
        %vm556 = vmand %vm348, %vm492
        %vm557 = vmand %vm349, %vm493
        %vm558 = vmand %vm350, %vm494
        %vm559 = vmand %vm351, %vm495
        %vm560 = vmand %vm352, %vm496
        %vm561 = vmand %vm353, %vm497
        %vm562 = vmand %vm354, %vm498
        %vm563 = vmand %vm355, %vm499
        %vm564 = vmand %vm356, %vm500
        %vm565 = vmand %vm357, %vm501
        %vm566 = vmand %vm358, %vm502
        %vm567 = vmand %vm359, %vm503
        %vm568 = vmand %vm360, %vm504
        %vm569 = vmand %vm361, %vm505
        %vm570 = vmand %vm362, %vm506
        %vm571 = vmand %vm363, %vm507
        %vm572 = vmand %vm364, %vm508
        %vm573 = vmand %vm365, %vm509
        %vm574 = vmand %vm366, %vm510
        %vm575 = vmand %vm367, %vm511
        %vm576 = vmand %vm368, %vm512
        %vm577 = vmand %vm369, %vm513
        %vm578 = vmand %vm370, %vm514
        %vm579 = vmand %vm371, %vm515
        %vm580 = vmand %vm372, %vm516
        %vm581 = vmand %vm373, %vm517
        %vm582 = vmand %vm374, %vm518
        %vm583 = vmand %vm375, %vm519
        %vm584 = vmand %vm376, %vm520
        %vm585 = vmand %vm377, %vm521
        %vm586 = vmand %vm378, %vm522
        %vm587 = vmand %vm379, %vm523
        %vm588 = vmand %vm380, %vm524
        %vm589 = vmand %vm381, %vm525
        %vm590 = vmand %vm382, %vm526
        %vm591 = vmand %vm383, %vm527
        %vm592 = vmand %vm384, %vm528
        %vm593 = vmand %vm385, %vm529
        %vm594 = vmand %vm386, %vm530
        %vm595 = vmand %vm387, %vm531
        %vm596 = vmand %vm388, %vm532
        %vm597 = vmand %vm389, %vm533
        %vm598 = vmand %vm390, %vm534
        %vm599 = vmand %vm391, %vm535
        %vm600 = vmand %vm392, %vm536
        %vm601 = vmand %vm393, %vm537
        %v602 = vsel %vm538, 1, 0
        %v603 = vsel %vm539, 1, 0
        %v604 = vsel %vm540, 1, 0
        %v605 = vsel %vm541, 1, 0
        %v606 = vsel %vm542, 1, 0
        %v607 = vsel %vm543, 1, 0
        %v608 = vsel %vm544, 1, 0
        %v609 = vsel %vm545, 1, 0
        %v610 = vsel %vm546, 1, 0
        %v611 = vsel %vm547, 1, 0
        %v612 = vsel %vm548, 1, 0
        %v613 = vsel %vm549, 1, 0
        %v614 = vsel %vm550, 1, 0
        %v615 = vsel %vm551, 1, 0
        %v616 = vsel %vm552, 1, 0
        %v617 = vsel %vm553, 1, 0
        %v618 = vsel %vm554, 1, 0
        %v619 = vsel %vm555, 1, 0
        %v620 = vsel %vm556, 1, 0
        %v621 = vsel %vm557, 1, 0
        %v622 = vsel %vm558, 1, 0
        %v623 = vsel %vm559, 1, 0
        %v624 = vsel %vm560, 1, 0
        %v625 = vsel %vm561, 1, 0
        %v626 = vsel %vm562, 1, 0
        %v627 = vsel %vm563, 1, 0
        %v628 = vsel %vm564, 1, 0
        %v629 = vsel %vm565, 1, 0
        %v630 = vsel %vm566, 1, 0
        %v631 = vsel %vm567, 1, 0
        %v632 = vsel %vm568, 1, 0
        %v633 = vsel %vm569, 1, 0
        %v634 = vsel %vm570, 1, 0
        %v635 = vsel %vm571, 1, 0
        %v636 = vsel %vm572, 1, 0
        %v637 = vsel %vm573, 1, 0
        %v638 = vsel %vm574, 1, 0
        %v639 = vsel %vm575, 1, 0
        %v640 = vsel %vm576, 1, 0
        %v641 = vsel %vm577, 1, 0
        %v642 = vsel %vm578, 1, 0
        %v643 = vsel %vm579, 1, 0
        %v644 = vsel %vm580, 1, 0
        %v645 = vsel %vm581, 1, 0
        %v646 = vsel %vm582, 1, 0
        %v647 = vsel %vm583, 1, 0
        %v648 = vsel %vm584, 1, 0
        %v649 = vsel %vm585, 1, 0
        %v650 = vsel %vm586, 1, 0
        %v651 = vsel %vm587, 1, 0
        %v652 = vsel %vm588, 1, 0
        %v653 = vsel %vm589, 1, 0
        %v654 = vsel %vm590, 1, 0
        %v655 = vsel %vm591, 1, 0
        %v656 = vsel %vm592, 1, 0
        %v657 = vsel %vm593, 1, 0
        %v658 = vsel %vm594, 1, 0
        %v659 = vsel %vm595, 1, 0
        %v660 = vsel %vm596, 1, 0
        %v661 = vsel %vm597, 1, 0
        %v662 = vsel %vm598, 1, 0
        %v663 = vsel %vm599, 1, 0
        %v664 = vsel %vm600, 1, 0
        %v665 = vsel %vm601, 1, 0
        %v666 = vcvt.s32.f32 %v602
        %v667 = vcvt.s32.f32 %v603
        %v668 = vcvt.s32.f32 %v604
        %v669 = vcvt.s32.f32 %v605
        %v670 = vcvt.s32.f32 %v606
        %v671 = vcvt.s32.f32 %v607
        %v672 = vcvt.s32.f32 %v608
        %v673 = vcvt.s32.f32 %v609
        %v674 = vcvt.s32.f32 %v610
        %v675 = vcvt.s32.f32 %v611
        %v676 = vcvt.s32.f32 %v612
        %v677 = vcvt.s32.f32 %v613
        %v678 = vcvt.s32.f32 %v614
        %v679 = vcvt.s32.f32 %v615
        %v680 = vcvt.s32.f32 %v616
        %v681 = vcvt.s32.f32 %v617
        %v682 = vcvt.s32.f32 %v618
        %v683 = vcvt.s32.f32 %v619
        %v684 = vcvt.s32.f32 %v620
        %v685 = vcvt.s32.f32 %v621
        %v686 = vcvt.s32.f32 %v622
        %v687 = vcvt.s32.f32 %v623
        %v688 = vcvt.s32.f32 %v624
        %v689 = vcvt.s32.f32 %v625
        %v690 = vcvt.s32.f32 %v626
        %v691 = vcvt.s32.f32 %v627
        %v692 = vcvt.s32.f32 %v628
        %v693 = vcvt.s32.f32 %v629
        %v694 = vcvt.s32.f32 %v630
        %v695 = vcvt.s32.f32 %v631
        %v696 = vcvt.s32.f32 %v632
        %v697 = vcvt.s32.f32 %v633
        %v698 = vcvt.s32.f32 %v634
        %v699 = vcvt.s32.f32 %v635
        %v700 = vcvt.s32.f32 %v636
        %v701 = vcvt.s32.f32 %v637
        %v702 = vcvt.s32.f32 %v638
        %v703 = vcvt.s32.f32 %v639
        %v704 = vcvt.s32.f32 %v640
        %v705 = vcvt.s32.f32 %v641
        %v706 = vcvt.s32.f32 %v642
        %v707 = vcvt.s32.f32 %v643
        %v708 = vcvt.s32.f32 %v644
        %v709 = vcvt.s32.f32 %v645
        %v710 = vcvt.s32.f32 %v646
        %v711 = vcvt.s32.f32 %v647
        %v712 = vcvt.s32.f32 %v648
        %v713 = vcvt.s32.f32 %v649
        %v714 = vcvt.s32.f32 %v650
        %v715 = vcvt.s32.f32 %v651
        %v716 = vcvt.s32.f32 %v652
        %v717 = vcvt.s32.f32 %v653
        %v718 = vcvt.s32.f32 %v654
        %v719 = vcvt.s32.f32 %v655
        %v720 = vcvt.s32.f32 %v656
        %v721 = vcvt.s32.f32 %v657
        %v722 = vcvt.s32.f32 %v658
        %v723 = vcvt.s32.f32 %v659
        %v724 = vcvt.s32.f32 %v660
        %v725 = vcvt.s32.f32 %v661
        %v726 = vcvt.s32.f32 %v662
        %v727 = vcvt.s32.f32 %v663
        %v728 = vcvt.s32.f32 %v664
        %v729 = vcvt.s32.f32 %v665
        %v730 = vld [vmem:[%s3] sm:$0xff]
        %v731 = vld [vmem:[%s3 + $0x8] sm:$0xff]
        %v732 = vld [vmem:[%s3 + $0x10] sm:$0xff]
        %v733 = vld [vmem:[%s3 + $0x18] sm:$0xff]
        %734 = vmatprep.subr.mxu0 %v667
        %735 = vmatpush1.msra.mxu0 %v666
        %736 = vmatprep.subr.mxu0 %v671
        %737 = vmatpush1.msra.mxu0 %v670
        %738 = vmatprep.subr.mxu0 %v675
        %739 = vmatpush1.msra.mxu0 %v674
        %740 = vmatprep.subr.mxu0 %v679
        %741 = vmatpush1.msra.mxu0 %v678
        %742 = vmatprep.subr.mxu0 %v683
        %743 = vmatpush1.msra.mxu0 %v682
        %744 = vmatprep.subr.mxu0 %v687
        %745 = vmatpush1.msra.mxu0 %v686
        %746 = vmatprep.subr.mxu0 %v691
        %747 = vmatpush1.msra.mxu0 %v690
        %748 = vmatprep.subr.mxu0 %v695
        %749 = vmatpush1.msra.mxu0 %v694
        %750 = vmatprep.subr.mxu0 %v699
        %751 = vmatpush1.msra.mxu0 %v698
        %752 = vmatprep.subr.mxu0 %v703
        %753 = vmatpush1.msra.mxu0 %v702
        %754 = vmatprep.subr.mxu0 %v707
        %755 = vmatpush1.msra.mxu0 %v706
        %756 = vmatprep.subr.mxu0 %v711
        %757 = vmatpush1.msra.mxu0 %v710
        %758 = vmatprep.subr.mxu0 %v715
        %759 = vmatpush1.msra.mxu0 %v714
        %760 = vmatprep.subr.mxu0 %v719
        %761 = vmatpush1.msra.mxu0 %v718
        %762 = vmatprep.subr.mxu0 %v723
        %763 = vmatpush1.msra.mxu0 %v722
        %764 = vmatprep.subr.mxu0 %v727
        %765 = vmatpush1.msra.mxu0 %v726
        %766 = vmatprep.subr.mxu0 0.0
        %767 = vmatpush1.msra.mxu0 0.0
        %768 = vmatprep.subr.mxu0 0.0
        %769 = vmatpush1.msra.mxu0 0.0
        %770 = vmatprep.subr.mxu0 0.0
        %771 = vmatpush1.msra.mxu0 0.0
        %772 = vmatprep.subr.mxu0 0.0
        %773 = vmatpush1.msra.mxu0 0.0
        %774 = vmatprep.subr.mxu0 0.0
        %775 = vmatpush1.msra.mxu0 0.0
        %776 = vmatprep.subr.mxu0 0.0
        %777 = vmatpush1.msra.mxu0 0.0
        %778 = vmatprep.subr.mxu0 0.0
        %779 = vmatpush1.msra.mxu0 0.0
        %780 = vmatprep.subr.mxu0 0.0
        %781 = vmatpush1.msra.mxu0 0.0
        %782 = vmatprep.subr.mxu0 0.0
        %783 = vmatpush1.msra.mxu0 0.0
        %784 = vmatprep.subr.mxu0 0.0
        %785 = vmatpush1.msra.mxu0 0.0
        %786 = vmatprep.subr.mxu0 0.0
        %787 = vmatpush1.msra.mxu0 0.0
        %788 = vmatprep.subr.mxu0 0.0
        %789 = vmatpush1.msra.mxu0 0.0
        %790 = vmatprep.subr.mxu0 0.0
        %791 = vmatpush1.msra.mxu0 0.0
        %792 = vmatprep.subr.mxu0 0.0
        %793 = vmatpush1.msra.mxu0 0.0
        %794 = vmatprep.subr.mxu0 0.0
        %795 = vmatpush1.msra.mxu0 0.0
        %796 = vmatprep.subr.mxu0 0.0
        %797 = vmatpush1.msra.mxu0 0.0
        %798 = vmatprep.mubr.f32.mxu0 0.0
        %799 = vmatmul.mubr.f32.gmra.mrb[0].mxu0 %v730
        %v800 = vpop.f32.mrb[0].mxu0
        %v801 = vadd.f32 0.0, %v800
        %v802 = vpop.f32.mrb[0].mxu0
        %v803 = vadd.f32 0.0, %v802
        %804 = vmatprep.mubr.f32.mxu0 0.0
        %805 = vmatmul.mubr.f32.gmra.mrb[0].mxu0 %v731
        %v806 = vpop.f32.mrb[0].mxu0
        %v807 = vadd.f32 0.0, %v806
        %v808 = vpop.f32.mrb[0].mxu0
        %v809 = vadd.f32 0.0, %v808
        %810 = vmatprep.mubr.f32.mxu0 0.0
        %811 = vmatmul.mubr.f32.gmra.mrb[0].mxu0 %v732
        %v812 = vpop.f32.mrb[0].mxu0
        %v813 = vadd.f32 0.0, %v812
        %v814 = vpop.f32.mrb[0].mxu0
        %v815 = vadd.f32 0.0, %v814
        %816 = vmatprep.mubr.f32.mxu0 0.0
        %817 = vmatmul.mubr.f32.gmra.mrb[0].mxu0 %v733
        %v818 = vpop.f32.mrb[0].mxu0
        %v819 = vadd.f32 0.0, %v818
        %v820 = vpop.f32.mrb[0].mxu0
        %v821 = vadd.f32 0.0, %v820
        %822 = vdwg.mxu0
        %823 = vmatprep.subr.mxu0 %v669
        %824 = vmatpush1.msra.mxu0 %v668
        %825 = vmatprep.subr.mxu0 %v673
        %826 = vmatpush1.msra.mxu0 %v672
        %827 = vmatprep.subr.mxu0 %v677
        %828 = vmatpush1.msra.mxu0 %v676
        %829 = vmatprep.subr.mxu0 %v681
        %830 = vmatpush1.msra.mxu0 %v680
        %831 = vmatprep.subr.mxu0 %v685
        %832 = vmatpush1.msra.mxu0 %v684
        %833 = vmatprep.subr.mxu0 %v689
        %834 = vmatpush1.msra.mxu0 %v688
        %835 = vmatprep.subr.mxu0 %v693
        %836 = vmatpush1.msra.mxu0 %v692
        %837 = vmatprep.subr.mxu0 %v697
        %838 = vmatpush1.msra.mxu0 %v696
        %839 = vmatprep.subr.mxu0 %v701
        %840 = vmatpush1.msra.mxu0 %v700
        %841 = vmatprep.subr.mxu0 %v705
        %842 = vmatpush1.msra.mxu0 %v704
        %843 = vmatprep.subr.mxu0 %v709
        %844 = vmatpush1.msra.mxu0 %v708
        %845 = vmatprep.subr.mxu0 %v713
        %846 = vmatpush1.msra.mxu0 %v712
        %847 = vmatprep.subr.mxu0 %v717
        %848 = vmatpush1.msra.mxu0 %v716
        %849 = vmatprep.subr.mxu0 %v721
        %850 = vmatpush1.msra.mxu0 %v720
        %851 = vmatprep.subr.mxu0 %v725
        %852 = vmatpush1.msra.mxu0 %v724
        %853 = vmatprep.subr.mxu0 %v729
        %854 = vmatpush1.msra.mxu0 %v728
        %855 = vmatprep.subr.mxu0 0.0
        %856 = vmatpush1.msra.mxu0 0.0
        %857 = vmatprep.subr.mxu0 0.0
        %858 = vmatpush1.msra.mxu0 0.0
        %859 = vmatprep.subr.mxu0 0.0
        %860 = vmatpush1.msra.mxu0 0.0
        %861 = vmatprep.subr.mxu0 0.0
        %862 = vmatpush1.msra.mxu0 0.0
        %863 = vmatprep.subr.mxu0 0.0
        %864 = vmatpush1.msra.mxu0 0.0
        %865 = vmatprep.subr.mxu0 0.0
        %866 = vmatpush1.msra.mxu0 0.0
        %867 = vmatprep.subr.mxu0 0.0
        %868 = vmatpush1.msra.mxu0 0.0
        %869 = vmatprep.subr.mxu0 0.0
        %870 = vmatpush1.msra.mxu0 0.0
        %871 = vmatprep.subr.mxu0 0.0
        %872 = vmatpush1.msra.mxu0 0.0
        %873 = vmatprep.subr.mxu0 0.0
        %874 = vmatpush1.msra.mxu0 0.0
        %875 = vmatprep.subr.mxu0 0.0
        %876 = vmatpush1.msra.mxu0 0.0
        %877 = vmatprep.subr.mxu0 0.0
        %878 = vmatpush1.msra.mxu0 0.0
        %879 = vmatprep.subr.mxu0 0.0
        %880 = vmatpush1.msra.mxu0 0.0
        %881 = vmatprep.subr.mxu0 0.0
        %882 = vmatpush1.msra.mxu0 0.0
        %883 = vmatprep.subr.mxu0 0.0
        %884 = vmatpush1.msra.mxu0 0.0
        %885 = vmatprep.subr.mxu0 0.0
        %886 = vmatpush1.msra.mxu0 0.0
        %887 = vmatprep.mubr.f32.mxu0 0.0
        %888 = vmatmul.mubr.f32.gmra.mrb[0].mxu0 %v730
        %v889 = vpop.f32.mrb[0].mxu0
        %v890 = vadd.f32 0.0, %v889
        %v891 = vpop.f32.mrb[0].mxu0
        %v892 = vadd.f32 0.0, %v891
        %893 = vmatprep.mubr.f32.mxu0 0.0
        %894 = vmatmul.mubr.f32.gmra.mrb[0].mxu0 %v731
        %v895 = vpop.f32.mrb[0].mxu0
        %v896 = vadd.f32 0.0, %v895
        %v897 = vpop.f32.mrb[0].mxu0
        %v898 = vadd.f32 0.0, %v897
        %899 = vmatprep.mubr.f32.mxu0 0.0
        %900 = vmatmul.mubr.f32.gmra.mrb[0].mxu0 %v732
        %v901 = vpop.f32.mrb[0].mxu0
        %v902 = vadd.f32 0.0, %v901
        %v903 = vpop.f32.mrb[0].mxu0
        %v904 = vadd.f32 0.0, %v903
        %905 = vmatprep.mubr.f32.mxu0 0.0
        %906 = vmatmul.mubr.f32.gmra.mrb[0].mxu0 %v733
        %v907 = vpop.f32.mrb[0].mxu0
        %v908 = vadd.f32 0.0, %v907
        %v909 = vpop.f32.mrb[0].mxu0
        %v910 = vadd.f32 0.0, %v909
        %911 = vdwg.mxu0
        %912 = vst [vmem:[%s189] sm:$0xff] %v801
        %913 = vst [vmem:[%s189 + $0x8] sm:$0xff] %v803
        %914 = vst [vmem:[%s189 + $0x10] sm:$0xff] %v890
        %915 = vst [vmem:[%s189 + $0x18] sm:$0xff] %v892
        %916 = vst [vmem:[%s189 + $0x20] sm:$0xff] %v807
        %917 = vst [vmem:[%s189 + $0x28] sm:$0xff] %v809
        %918 = vst [vmem:[%s189 + $0x30] sm:$0xff] %v896
        %919 = vst [vmem:[%s189 + $0x38] sm:$0xff] %v898
        %920 = vst [vmem:[%s189 + $0x40] sm:$0xff] %v813
        %921 = vst [vmem:[%s189 + $0x48] sm:$0xff] %v815
        %922 = vst [vmem:[%s189 + $0x50] sm:$0xff] %v902
        %923 = vst [vmem:[%s189 + $0x58] sm:$0xff] %v904
        %924 = vst [vmem:[%s189 + $0x60] sm:$0xff] %v819
        %925 = vst [vmem:[%s189 + $0x68] sm:$0xff] %v821
        %926 = vst [vmem:[%s189 + $0x70] sm:$0xff] %v908
        %927 = vst [vmem:[%s189 + $0x78] sm:$0xff] %v910
        %s928 = sand.u32 %s115, 1
        %s929 = scalar_lea.sflag [#allocation3], %s928
        %s930 = sand.u32 %s115, 1
        %s931 = smul.addr %s930, 128
        %s932 = scalar_lea.vmem [#allocation2], %s931
        // Predicated region
        $region37: #{tpu_custom_call.1} parent=35 // pred_check
          %p933 = pneg %p125
        $region38: #{tpu_custom_call.1} parent=35 // pred_check_branch
          %935 = sbr.rel (%p933) target = $region40
        $region39: #{tpu_custom_call.1} parent=35 // pred_region
          %s936 = smul.u32 4, %s18
          %s938 = ssub.s32 2048, 2048
          %939 = vsyncadd %s929, %s938
          %s940 = smul.addr %s936, 128
          %s941 = scalar_lea.hbm %s4, %s940
          %s942 = sshll.u32 %s932, 4
          %s943 = int_to_ptr.vmem [resolvable:$true] %s942
          %948 = dma.vmem_to_hbm [thread:$0]  %s943, 2048, %s941, %s929, 512, 1024, 32
        $region40: #{tpu_custom_call.1} parent=35 // pred_fallthru
          _
      $region36: #{tpu_custom_call.1} parent=5 // pred_fallthru
        _
      %p949 = scmp.le.s32.totalorder 2, %s13
      // Predicated region
      $region41: #{tpu_custom_call.1} parent=5 // pred_check
        %p950 = pneg %p949
      $region42: #{tpu_custom_call.1} parent=5 // pred_check_branch
        %952 = sbr.rel (%p950) target = $region44
      $region43: #{tpu_custom_call.1} parent=5 // pred_region
        %s953 = ssub.s32 %s13, 2
        // Predicated region
        $region45: #{tpu_custom_call.1} parent=43 // pred_check
          %p954 = pneg %p131
        $region46: #{tpu_custom_call.1} parent=43 // pred_check_branch
          %956 = sbr.rel (%p954) target = $region48
        $region47: #{tpu_custom_call.1} parent=43 // pred_region
          %s957 = sand.u32 %s116, 1
          %s958 = scalar_lea.sflag [#allocation3], %s957
          %s959 = sand.u32 %s116, 1
          %s960 = smul.addr %s959, 128
          %s961 = scalar_lea.vmem [#allocation2], %s960
          %962 = dma.done %s958, 2048
        $region48: #{tpu_custom_call.1} parent=43 // pred_fallthru
          _
      $region44: #{tpu_custom_call.1} parent=5 // pred_fallthru
        _
    $region6: #{tpu_custom_call.1} parent=1 // loop_footer
      %s17 = sadd.s32 1, %s13
    $region7: #{tpu_custom_call.1} parent=1 // loop_footer_branch
      %12 = sbr.rel target = $region3
    $region8: #{tpu_custom_call.1} parent=1 // loop_exit
      _
    %963 = vsyncpa [#allocation3], 1
    %s964 = scalar_lea.sflag [#allocation3], 1
    %965 = vsyncpa %s964, 1

</llo_original>
